<compile_context>
chip_gen: v7x
topology: tpu7x:2x2x1
jax: 0.10.0
libtpu: 0.0.40
codegen_flags: <defaults>
</compile_context>

<pallas_src>
import jax
import jax.numpy as jnp
from jax.experimental import pallas as pl
from jax.experimental.pallas import tpu as pltpu

_VMEM_LIMIT = 32 * 1024 * 1024     # safe on v5e/v6e/v7x; tiles sized well under it
_TILE_TARGET_BYTES = 2 << 20       # ~2 MiB per pipelined input block


def _round_up(x, m):
    return ((x + m - 1) // m) * m


def _pick_tile(total, per_row_bytes, cap):
    """Largest row tile <= cap targeting ~_TILE_TARGET_BYTES; sublane-friendly."""
    t = max(1, min(cap, _TILE_TARGET_BYTES // max(per_row_bytes, 1)))
    if t >= total:
        return total                      # single block == full extent (always legal)
    return max(8, (t // 8) * 8)           # multiple of 8 -> clean sublane tiling


# ---------------------------------------------------------------------------
# Pass 1: per-tile BN statistics of q = x @ W + b.  q never touches HBM.
# ---------------------------------------------------------------------------
def _stats_kernel(x_ref, w_ref, b_ref, sum_ref, sq_ref):
    q = jnp.dot(x_ref[...].astype(jnp.float32), w_ref[...],
                preferred_element_type=jnp.float32) + b_ref[...]      # (TM, D)
    sum_ref[...] = jnp.sum(q, axis=0, keepdims=True)                  # (1, D)
    sq_ref[...] = jnp.sum(q * q, axis=0, keepdims=True)               # (1, D)


# ---------------------------------------------------------------------------
# Pass 2: fused Linear+BN recompute, per-feature softmax over L, weighted pool.
# Processes TB batch elements per grid step; L stays on the sublane axis.
# ---------------------------------------------------------------------------
def _pool_kernel(wf_ref, sh_ref, x_ref, pv_ref, o_ref):
    tb, seq_l, k = x_ref.shape
    d = wf_ref.shape[1]
    # q = BatchNorm(Linear(x)) with BN + bias folded into wf/sh.
    x2 = x_ref[...].astype(jnp.float32).reshape(tb * seq_l, k)
    q = jnp.dot(x2, wf_ref[...], preferred_element_type=jnp.float32) + sh_ref[...]
    q = q.reshape(tb, seq_l, d)                                       # (TB, L, D)
    qmean = jnp.mean(q, axis=1, keepdims=True)                        # (TB, 1, D)
    s = q * qmean                                                     # Hs * tmp_K
    # softmax over L, independently per (batch, feature); L = sublane axis reductions.
    m = jnp.max(s, axis=1, keepdims=True)
    e = jnp.exp(s - m)
    denom = jnp.sum(e, axis=1, keepdims=True)
    w = e * pl.reciprocal(denom, approx=True)                         # EUP slot, not VALU divide
    pooled = jnp.sum(pv_ref[...].astype(jnp.float32) * w, axis=1)     # (TB, D)
    o_ref[...] = pooled.astype(o_ref.dtype)


def self_pooling_dir(probe_value, probe_base, w, b, bn_gamma, bn_beta, eps=1e-5):
    B, L, K = probe_base.shape
    D = w.shape[0]
    N = B * L

    w_t = w.T.astype(jnp.float32)                  # (K, D)
    b_f = b.astype(jnp.float32)

    # ---------------- pass 1: BN batch statistics ----------------
    TM = _pick_tile(N, (K + D) * 4, cap=1024)
    N_pad = _round_up(N, TM)
    x = probe_base.reshape(N, K)
    if N_pad != N:
        # zero rows give q == b exactly; corrected analytically below.
        x = jnp.pad(x, ((0, N_pad - N), (0, 0)))
    grid_s = N_pad // TM

    sum_parts, sq_parts = pl.pallas_call(
        _stats_kernel,
        out_shape=(jax.ShapeDtypeStruct((grid_s, 1, D), jnp.float32),
                   jax.ShapeDtypeStruct((grid_s, 1, D), jnp.float32)),
        grid=(grid_s,),
        in_specs=[
            pl.BlockSpec((TM, K), lambda i: (i, 0)),
            pl.BlockSpec((K, D), lambda i: (0, 0)),
            pl.BlockSpec((1, D), lambda i: (0, 0)),
        ],
        out_specs=(
            pl.BlockSpec((pl.Squeezed(), 1, D), lambda i: (i, 0, 0)),
            pl.BlockSpec((pl.Squeezed(), 1, D), lambda i: (i, 0, 0)),
        ),
        compiler_params=pltpu.CompilerParams(
            dimension_semantics=("parallel",),
            vmem_limit_bytes=_VMEM_LIMIT),
    )(x, w_t, b_f.reshape(1, D))

    pad_rows = N_pad - N
    sum_q = jnp.sum(sum_parts, axis=(0, 1)) - pad_rows * b_f
    sum_q2 = jnp.sum(sq_parts, axis=(0, 1)) - pad_rows * (b_f * b_f)
    mean = sum_q / N
    # TODO(synk): training-mode (biased) batch statistics only; eval-mode running stats
    #             and running-stat buffer updates are not modeled.
    var = jnp.maximum(sum_q2 / N - mean * mean, 0.0)   # f32, clamped vs cancellation
    inv = bn_gamma.astype(jnp.float32) / jnp.sqrt(var + eps)
    w_fold = w_t * inv[None, :]                                      # Linear+BN folded
    shift = ((b_f - mean) * inv + bn_beta.astype(jnp.float32)).reshape(1, D)

    # ---------------- pass 2: fused attention pooling ----------------
    TB = _pick_tile(B, L * (K + D) * 4, cap=1024)
    B_pad = _round_up(B, TB)
    pb, pv = probe_base, probe_value
    if B_pad != B:
        # padded rows: q == shift -> uniform softmax; probe_value == 0 -> pooled == 0
        pb = jnp.pad(pb, ((0, B_pad - B), (0, 0), (0, 0)))
        pv = jnp.pad(pv, ((0, B_pad - B), (0, 0), (0, 0)))
    grid_p = B_pad // TB

    pooled = pl.pallas_call(
        _pool_kernel,
        out_shape=jax.ShapeDtypeStruct((B_pad, D), probe_value.dtype),
        grid=(grid_p,),
        in_specs=[
            pl.BlockSpec((K, D), lambda i: (0, 0)),          # folded weights, resident
            pl.BlockSpec((1, D), lambda i: (0, 0)),          # folded shift, resident
            pl.BlockSpec((TB, L, K), lambda i: (i, 0, 0)),   # probe_base batch tile
            pl.BlockSpec((TB, L, D), lambda i: (i, 0, 0)),   # probe_value batch tile
        ],
        # Output block last dim = full feature extent D (lane-dense as the data allows;
        # fully unmasked stores once production D >= 128).
        out_specs=pl.BlockSpec((TB, D), lambda i: (i, 0)),
        compiler_params=pltpu.CompilerParams(
            dimension_semantics=("parallel",),
            vmem_limit_bytes=_VMEM_LIMIT),
    )(w_fold, shift, pb, pv)

    pool_probe = pooled[:B]
    return pool_probe, pool_probe


def _reference(probe_value, probe_base, w, b, bn_gamma, bn_beta, eps=1e-5):
    B, L, K = probe_base.shape
    D = w.shape[0]
    q = probe_base.reshape(B * L, K) @ w.T + b
    mu = jnp.mean(q, axis=0)
    var = jnp.mean((q - mu) ** 2, axis=0)
    q = (q - mu) / jnp.sqrt(var + eps) * bn_gamma + bn_beta
    q = q.reshape(B, L, D)
    s = q * jnp.mean(q, axis=1, keepdims=True)
    wgt = jax.nn.softmax(s, axis=1)
    return jnp.sum(probe_value * wgt, axis=1)


if __name__ == "__main__":
    B, L = 2, 8
    input_num, output_num = 16, 32

    key = jax.random.PRNGKey(0)
    k_w, k_pv, k_pb = jax.random.split(key, 3)

    # Deterministic param init mirroring the module's __init__:
    #   Linear: kaiming_normal(mode='fan_out') -> std = sqrt(2 / out_features); bias = 0
    #   BatchNorm1d: weight = 1, bias = 0
    std = (2.0 / output_num) ** 0.5
    w = std * jax.random.normal(k_w, (output_num, input_num), jnp.float32)
    b = jnp.zeros((output_num,), jnp.float32)
    bn_gamma = jnp.ones((output_num,), jnp.float32)
    bn_beta = jnp.zeros((output_num,), jnp.float32)

    probe_value = jax.random.normal(k_pv, (B, L, output_num), jnp.float32)
    probe_base = jax.random.normal(k_pb, (B, L, input_num), jnp.float32)

    out1, out2 = self_pooling_dir(probe_value, probe_base, w, b, bn_gamma, bn_beta)
    jax.block_until_ready((out1, out2))
    assert out1.shape == (B, output_num) and out2.shape == (B, output_num)

    ref = _reference(probe_value, probe_base, w, b, bn_gamma, bn_beta)
    # loose tolerance accommodates the EUP approx-reciprocal in the softmax
    assert jnp.allclose(out1, ref, rtol=2e-2, atol=2e-2), float(jnp.max(jnp.abs(out1 - ref)))

    print("KERNEL_OK")
</pallas_src>

<mosaic_0001>
module attributes {stable_mosaic.version = 11 : i64} {
  func.func @_stats_kernel(%arg0: i32, %arg1: memref<16x16xf32, #tpu.memory_space<vmem>>, %arg2: memref<16x32xf32, #tpu.memory_space<vmem>>, %arg3: memref<1x32xf32, #tpu.memory_space<vmem>>, %arg4: memref<1x1x32xf32, #tpu.memory_space<vmem>>, %arg5: memref<1x1x32xf32, #tpu.memory_space<vmem>>) attributes {dimension_semantics = [#tpu.dimension_semantics<parallel>], iteration_bounds = array<i64: 1>, scalar_prefetch = 0 : i64, scratch_operands = 0 : i64, tpu.core_type = #tpu.core_type<tc>, window_params = [{transform_indices = @transform_0, window_bounds = array<i64: 16, 16>}, {pipeline_mode = #tpu.pipeline_mode<synchronous>, transform_indices = @transform_1, window_bounds = array<i64: 16, 32>}, {pipeline_mode = #tpu.pipeline_mode<synchronous>, transform_indices = @transform_2, window_bounds = array<i64: 1, 32>}, {transform_indices = @transform_3, window_bounds = array<i64: 1, 1, 32>}, {transform_indices = @transform_4, window_bounds = array<i64: 1, 1, 32>}]} {
    %c0 = arith.constant 0 : index
    %c0_0 = arith.constant 0 : index
    %0 = vector.load %arg1[%c0, %c0_0] : memref<16x16xf32, #tpu.memory_space<vmem>>, vector<16x16xf32>
    %c0_1 = arith.constant 0 : index
    %c0_2 = arith.constant 0 : index
    %1 = vector.load %arg2[%c0_1, %c0_2] : memref<16x32xf32, #tpu.memory_space<vmem>>, vector<16x32xf32>
    %cst = arith.constant dense<0.000000e+00> : vector<16x32xf32>
    %2 = tpu.matmul %0, %1, %cst {dimension_numbers = #tpu.dot_dimension_numbers<[1], [0], [0], [1], [0, 0, 1, 1], [], []>} : vector<16x16xf32>, vector<16x32xf32>, vector<16x32xf32> -> vector<16x32xf32>
    %c0_3 = arith.constant 0 : index
    %c0_4 = arith.constant 0 : index
    %3 = vector.load %arg3[%c0_3, %c0_4] : memref<1x32xf32, #tpu.memory_space<vmem>>, vector<1x32xf32>
    %4 = vector.broadcast %3 : vector<1x32xf32> to vector<16x32xf32>
    %5 = arith.addf %2, %4 : vector<16x32xf32>
    %cst_5 = arith.constant dense<0.000000e+00> : vector<32xf32>
    %6 = vector.multi_reduction <add>, %5, %cst_5 [0] : vector<16x32xf32> to vector<32xf32>
    %7 = vector.shape_cast %6 : vector<32xf32> to vector<1x32xf32>
    %c0_6 = arith.constant 0 : index
    %c0_7 = arith.constant 0 : index
    %c0_8 = arith.constant 0 : index
    %8 = vector.load %arg4[%c0_6, %c0_7, %c0_8] : memref<1x1x32xf32, #tpu.memory_space<vmem>>, vector<1x1x32xf32>
    %9 = vector.shape_cast %8 : vector<1x1x32xf32> to vector<1x32xf32>
    %10 = vector.shape_cast %7 : vector<1x32xf32> to vector<1x1x32xf32>
    tpu.vector_store %arg4[%c0_6, %c0_7, %c0_8], %10 {strides = array<i32>} : memref<1x1x32xf32, #tpu.memory_space<vmem>>, vector<1x1x32xf32>,
    %11 = arith.mulf %5, %5 : vector<16x32xf32>
    %cst_9 = arith.constant dense<0.000000e+00> : vector<32xf32>
    %12 = vector.multi_reduction <add>, %11, %cst_9 [0] : vector<16x32xf32> to vector<32xf32>
    %13 = vector.shape_cast %12 : vector<32xf32> to vector<1x32xf32>
    %c0_10 = arith.constant 0 : index
    %c0_11 = arith.constant 0 : index
    %c0_12 = arith.constant 0 : index
    %14 = vector.load %arg5[%c0_10, %c0_11, %c0_12] : memref<1x1x32xf32, #tpu.memory_space<vmem>>, vector<1x1x32xf32>
    %15 = vector.shape_cast %14 : vector<1x1x32xf32> to vector<1x32xf32>
    %16 = vector.shape_cast %13 : vector<1x32xf32> to vector<1x1x32xf32>
    tpu.vector_store %arg5[%c0_10, %c0_11, %c0_12], %16 {strides = array<i32>} : memref<1x1x32xf32, #tpu.memory_space<vmem>>, vector<1x1x32xf32>,
    return
  }
  func.func @transform_0(%arg0: i32) -> (i32, i32) {
    %c0_i32 = arith.constant 0 : i32
    %c0_i32_0 = arith.constant 0 : i32
    return %arg0, %c0_i32 : i32, i32
  }
  func.func @transform_1(%arg0: i32) -> (i32, i32) {
    %c0_i32 = arith.constant 0 : i32
    %c0_i32_0 = arith.constant 0 : i32
    %c0_i32_1 = arith.constant 0 : i32
    return %c0_i32, %c0_i32_0 : i32, i32
  }
  func.func @transform_2(%arg0: i32) -> (i32, i32) {
    %c0_i32 = arith.constant 0 : i32
    %c0_i32_0 = arith.constant 0 : i32
    %c0_i32_1 = arith.constant 0 : i32
    return %c0_i32, %c0_i32_0 : i32, i32
  }
  func.func @transform_3(%arg0: i32) -> (i32, i32, i32) {
    %c0_i32 = arith.constant 0 : i32
    %c0_i32_0 = arith.constant 0 : i32
    %c0_i32_1 = arith.constant 0 : i32
    return %arg0, %c0_i32, %c0_i32_0 : i32, i32, i32
  }
  func.func @transform_4(%arg0: i32) -> (i32, i32, i32) {
    %c0_i32 = arith.constant 0 : i32
    %c0_i32_0 = arith.constant 0 : i32
    %c0_i32_1 = arith.constant 0 : i32
    return %arg0, %c0_i32, %c0_i32_0 : i32, i32, i32
  }
}

</mosaic_0001>

<llo_original>
// kernel: tpu_custom_call.1
$region0: #{tpu_custom_call.1}
  #allocation0 [shape = 'u32[]', space=smem, size = 0x4, offset = 0x4, fixed_abs, tag = 'smem constant byte address 0x4 - core index']
  #allocation1 [shape = 'u32[144,128]{1,0:T(1,128)}', space=vmem, size = 0x12000, scoped, tag = 'internal scratch']
  %s0 = inlined_call_operand.hbm [shape: f32[16,16], index: 0, kind: input, shape index: {}]
  %s1 = inlined_call_operand.hbm [shape: f32[16,32], index: 1, kind: input, shape index: {}]
  %s2 = inlined_call_operand.vmem [shape: f32[1,32], index: 2, kind: input, shape index: {}]
  %s3 = inlined_call_operand.hbm [shape: f32[1,1,32], index: 3, kind: output, shape index: {0}]
  %s4 = inlined_call_operand.hbm [shape: f32[1,1,32], index: 4, kind: output, shape index: {1}]
  %5 = xla_tuple %s3, %s4
  %s6 = sld [smem:[#allocation0]]
  $region38: #{tpu_custom_call.1} parent=0
    _
  %s8 = ssub.s32 1, %s6
  %s9 = scalar_select 0, %s8, %s6
  $region1: #{tpu_custom_call.1} parent=0
    #allocation2 [shape = 'u8[8192]{0}', space=vmem, size = 0x2000, scoped, tag = 'input window, operand 0, single buffered']
    #allocation3 [shape = 's32[1]{0}', space=sflag, size = 0x4, scoped, tag = 'scoped memory for tpu_custom_call.1']
    #allocation4 [shape = 's32[1]{0}', space=sflag, size = 0x4, scoped, tag = 'scoped memory for tpu_custom_call.1']
    #allocation5 [shape = 'u8[8192]{0}', space=vmem, size = 0x2000, scoped, tag = 'input window, operand 1, single buffered']
    #allocation6 [shape = 's32[1]{0}', space=sflag, size = 0x4, scoped, tag = 'scoped memory for tpu_custom_call.1']
    #allocation7 [shape = 'u8[512]{0}', space=vmem, size = 0x400, scoped, tag = 'output window, operand 0, single buffered']
    #allocation8 [shape = 'u8[512]{0}', space=vmem, size = 0x400, scoped, tag = 'output window, operand 1, single buffered']
    #allocation9 [shape = 's32[1]{0}', space=sflag, size = 0x4, scoped, tag = 'scoped memory for tpu_custom_call.1']
    %10 = vsyncpa [#allocation3], 0
    %11 = vsyncpa [#allocation6], 0
    %12 = vsyncpa [#allocation4], 0
    %13 = vsyncpa [#allocation9], 0
    // Predicated region
    $region2: #{tpu_custom_call.1} parent=1 // pred_check
      _
    $region3: #{tpu_custom_call.1} parent=1 // pred_check_branch
      %15 = sbr.rel (0) target = $region5
    $region4: #{tpu_custom_call.1} parent=1 // pred_region
      %s17 = ssub.s32 256, 256
      %18 = vsyncadd [#allocation3], %s17
      %s19 = sshll.u32 [#allocation2], 4
      %s20 = int_to_ptr.vmem [resolvable:$true] %s19
      %25 = dma.hbm_to_vmem [thread:$0]  %s0, 256, %s20, [#allocation3], 128, 128, 8
    $region5: #{tpu_custom_call.1} parent=1 // pred_fallthru
      _
    // Predicated region
    $region6: #{tpu_custom_call.1} parent=1 // pred_check
      _
    $region7: #{tpu_custom_call.1} parent=1 // pred_check_branch
      %27 = sbr.rel (0) target = $region9
    $region8: #{tpu_custom_call.1} parent=1 // pred_region
      %s29 = ssub.s32 256, 256
      %30 = vsyncadd [#allocation6], %s29
      %s31 = sshll.u32 [#allocation5], 4
      %s32 = int_to_ptr.vmem [resolvable:$true] %s31
      %37 = dma.hbm_to_vmem [thread:$0]  %s1, 256, %s32, [#allocation6], 128, 128, 8
    $region9: #{tpu_custom_call.1} parent=1 // pred_fallthru
      _
    // Predicated region
    $region10: #{tpu_custom_call.1} parent=1 // pred_check
      _
    $region11: #{tpu_custom_call.1} parent=1 // pred_check_branch
      %39 = sbr.rel (0) target = $region13
    $region12: #{tpu_custom_call.1} parent=1 // pred_region
      _
    $region13: #{tpu_custom_call.1} parent=1 // pred_fallthru
      _
    // Predicated region
    $region14: #{tpu_custom_call.1} parent=1 // pred_check
      _
    $region15: #{tpu_custom_call.1} parent=1 // pred_check_branch
      %41 = sbr.rel (0) target = $region17
    $region16: #{tpu_custom_call.1} parent=1 // pred_region
      %42 = dma.done [#allocation3], 256
    $region17: #{tpu_custom_call.1} parent=1 // pred_fallthru
      _
    // Predicated region
    $region18: #{tpu_custom_call.1} parent=1 // pred_check
      _
    $region19: #{tpu_custom_call.1} parent=1 // pred_check_branch
      %44 = sbr.rel (0) target = $region21
    $region20: #{tpu_custom_call.1} parent=1 // pred_region
      %45 = dma.done [#allocation6], 256
    $region21: #{tpu_custom_call.1} parent=1 // pred_fallthru
      _
    %v46 = vld [vmem:[#allocation2] sm:$0xff]
    %v47 = vld [vmem:[#allocation2 + $0x8] sm:$0xff]
    %v48 = vld [vmem:[#allocation5] sm:$0xff]
    %v49 = vld [vmem:[#allocation5 + $0x8] sm:$0xff]
    %v50 = vld [vmem:[%s2] sm:$0x1]
    %v52 = vlaneseq
    %v53 = vshrl.u32 %v52, 7
    %v54 = vsub.s32 0, %v53
    %v55 = vrot.slane %v50, %v54
    %vm57 = vcmask 130048
    %v59 = vsel %vm57, %v46, 0
    %v62 = vsel %vm57, %v47, 0
    %64 = vmatprep.subr.mxu0 0.0
    %65 = vmatpush1.msra.mxu0 %v48
    %66 = vmatprep.subr.mxu0 0.0
    %67 = vmatpush1.msra.mxu0 %v49
    %68 = vmatprep.subr.mxu0 0.0
    %69 = vmatpush1.msra.mxu0 0.0
    %70 = vmatprep.subr.mxu0 0.0
    %71 = vmatpush1.msra.mxu0 0.0
    %72 = vmatprep.subr.mxu0 0.0
    %73 = vmatpush1.msra.mxu0 0.0
    %74 = vmatprep.subr.mxu0 0.0
    %75 = vmatpush1.msra.mxu0 0.0
    %76 = vmatprep.subr.mxu0 0.0
    %77 = vmatpush1.msra.mxu0 0.0
    %78 = vmatprep.subr.mxu0 0.0
    %79 = vmatpush1.msra.mxu0 0.0
    %80 = vmatprep.subr.mxu0 0.0
    %81 = vmatpush1.msra.mxu0 0.0
    %82 = vmatprep.subr.mxu0 0.0
    %83 = vmatpush1.msra.mxu0 0.0
    %84 = vmatprep.subr.mxu0 0.0
    %85 = vmatpush1.msra.mxu0 0.0
    %86 = vmatprep.subr.mxu0 0.0
    %87 = vmatpush1.msra.mxu0 0.0
    %88 = vmatprep.subr.mxu0 0.0
    %89 = vmatpush1.msra.mxu0 0.0
    %90 = vmatprep.subr.mxu0 0.0
    %91 = vmatpush1.msra.mxu0 0.0
    %92 = vmatprep.subr.mxu0 0.0
    %93 = vmatpush1.msra.mxu0 0.0
    %94 = vmatprep.subr.mxu0 0.0
    %95 = vmatpush1.msra.mxu0 0.0
    %96 = vmatprep.subr.mxu0 0.0
    %97 = vmatpush1.msra.mxu0 0.0
    %98 = vmatprep.subr.mxu0 0.0
    %99 = vmatpush1.msra.mxu0 0.0
    %100 = vmatprep.subr.mxu0 0.0
    %101 = vmatpush1.msra.mxu0 0.0
    %102 = vmatprep.subr.mxu0 0.0
    %103 = vmatpush1.msra.mxu0 0.0
    %104 = vmatprep.subr.mxu0 0.0
    %105 = vmatpush1.msra.mxu0 0.0
    %106 = vmatprep.subr.mxu0 0.0
    %107 = vmatpush1.msra.mxu0 0.0
    %108 = vmatprep.subr.mxu0 0.0
    %109 = vmatpush1.msra.mxu0 0.0
    %110 = vmatprep.subr.mxu0 0.0
    %111 = vmatpush1.msra.mxu0 0.0
    %112 = vmatprep.subr.mxu0 0.0
    %113 = vmatpush1.msra.mxu0 0.0
    %114 = vmatprep.subr.mxu0 0.0
    %115 = vmatpush1.msra.mxu0 0.0
    %116 = vmatprep.subr.mxu0 0.0
    %117 = vmatpush1.msra.mxu0 0.0
    %118 = vmatprep.subr.mxu0 0.0
    %119 = vmatpush1.msra.mxu0 0.0
    %120 = vmatprep.subr.mxu0 0.0
    %121 = vmatpush1.msra.mxu0 0.0
    %122 = vmatprep.subr.mxu0 0.0
    %123 = vmatpush1.msra.mxu0 0.0
    %124 = vmatprep.subr.mxu0 0.0
    %125 = vmatpush1.msra.mxu0 0.0
    %126 = vmatprep.subr.mxu0 0.0
    %127 = vmatpush1.msra.mxu0 0.0
    %128 = vmatprep.mubr.f32.mxu0 0.0
    %129 = vmatmul.mubr.f32.gmra.mrb[0].mxu0 %v59
    %v130 = vpop.f32.mrb[0].mxu0
    %v131 = vadd.f32 %v55, %v130
    %v132 = vpop.f32.mrb[0].mxu0
    %133 = vmatprep.mubr.f32.mxu0 0.0
    %134 = vmatmul.mubr.f32.gmra.mrb[0].mxu0 %v62
    %v135 = vpop.f32.mrb[0].mxu0
    %v136 = vadd.f32 %v55, %v135
    %v137 = vpop.f32.mrb[0].mxu0
    %138 = vdwg.mxu0
    %vm139 = vcmask 261120
    %v140 = vsel %vm139, %v131, 0.0
    %v141 = vsel %vm139, %v136, 0.0
    %v142 = vadd.f32 %v140, %v141
    %v143 = vrot.slane %v142, 4
    %v144 = vadd.f32 %v142, %v143
    %v145 = vrot.slane %v144, 2
    %v146 = vadd.f32 %v144, %v145
    %v147 = vrot.slane %v146, 1
    %v148 = vadd.f32 %v146, %v147
    %vm149 = vcmask 253952
    %150 = vst.msk [vmem:[#allocation7] sm:$0x1] %vm149, %v148
    %v151 = vmul.f32 %v131, %v131
    %v152 = vmul.f32 %v136, %v136
    %v153 = vsel %vm139, %v151, 0.0
    %v154 = vsel %vm139, %v152, 0.0
    %v155 = vadd.f32 %v153, %v154
    %v156 = vrot.slane %v155, 4
    %v157 = vadd.f32 %v155, %v156
    %v158 = vrot.slane %v157, 2
    %v159 = vadd.f32 %v157, %v158
    %v160 = vrot.slane %v159, 1
    %v161 = vadd.f32 %v159, %v160
    %162 = vst.msk [vmem:[#allocation8] sm:$0x1] %vm149, %v161
    // Predicated region
    $region22: #{tpu_custom_call.1} parent=1 // pred_check
      _
    $region23: #{tpu_custom_call.1} parent=1 // pred_check_branch
      %164 = sbr.rel (0) target = $region25
    $region24: #{tpu_custom_call.1} parent=1 // pred_region
      %s166 = ssub.s32 16, 16
      %167 = vsyncadd [#allocation4], %s166
      %s169 = sshll.u32 [#allocation7], 4
      %s170 = int_to_ptr.vmem [resolvable:$true] %s169
      %172 = dma.vmem_to_hbm [thread:$0]  %s170, 16, %s3, [#allocation4]
    $region25: #{tpu_custom_call.1} parent=1 // pred_fallthru
      _
    // Predicated region
    $region26: #{tpu_custom_call.1} parent=1 // pred_check
      _
    $region27: #{tpu_custom_call.1} parent=1 // pred_check_branch
      %174 = sbr.rel (0) target = $region29
    $region28: #{tpu_custom_call.1} parent=1 // pred_region
      %s176 = ssub.s32 16, 16
      %177 = vsyncadd [#allocation9], %s176
      %s179 = sshll.u32 [#allocation8], 4
      %s180 = int_to_ptr.vmem [resolvable:$true] %s179
      %182 = dma.vmem_to_hbm [thread:$0]  %s180, 16, %s4, [#allocation9]
    $region29: #{tpu_custom_call.1} parent=1 // pred_fallthru
      _
    // Predicated region
    $region30: #{tpu_custom_call.1} parent=1 // pred_check
      _
    $region31: #{tpu_custom_call.1} parent=1 // pred_check_branch
      %184 = sbr.rel (0) target = $region33
    $region32: #{tpu_custom_call.1} parent=1 // pred_region
      %185 = dma.done [#allocation4], 16
    $region33: #{tpu_custom_call.1} parent=1 // pred_fallthru
      _
    // Predicated region
    $region34: #{tpu_custom_call.1} parent=1 // pred_check
      _
    $region35: #{tpu_custom_call.1} parent=1 // pred_check_branch
      %187 = sbr.rel (0) target = $region37
    $region36: #{tpu_custom_call.1} parent=1 // pred_region
      %188 = dma.done [#allocation9], 16
    $region37: #{tpu_custom_call.1} parent=1 // pred_fallthru
      _
    %189 = vsyncpa [#allocation3], 1
    %190 = vsyncpa [#allocation6], 1
    %191 = vsyncpa [#allocation4], 1
    %192 = vsyncpa [#allocation9], 1

</llo_original>
